<compile_context>
chip_gen: v7x
topology: tpu7x:2x2x1
jax: 0.10.0
libtpu: 0.0.40
codegen_flags: <defaults>
</compile_context>

<pallas_src>
import jax
import jax.numpy as jnp
from jax import lax
from jax.experimental import pallas as pl
from jax.experimental.pallas import tpu as pltpu


def _round_up(x: int, m: int) -> int:
    return ((x + m - 1) // m) * m


def _relu_gram_kernel(a_ref, b_ref, o_ref, acc_ref):
    """One (tm, tn) output tile of relu(x) @ relu(x)^T, accumulated over k."""
    k = pl.program_id(2)

    @pl.when(k == 0)
    def _():
        acc_ref[...] = jnp.zeros_like(acc_ref)

    # ReLU per tile (single VPU op, free under the MXU work); keep input dtype.
    a = jnp.maximum(a_ref[...], 0.0)          # (tm, tk)
    b = jnp.maximum(b_ref[...], 0.0)          # (tn, tk)

    # Contract K on both operands -> (tm, tn). This is y @ y.T without an
    # explicit transpose (no XLU vxpose phase); f32 accumulation on the MXU.
    acc_ref[...] += lax.dot_general(
        a, b,
        dimension_numbers=(((1,), (1,)), ((), ())),
        preferred_element_type=jnp.float32,
    )

    @pl.when(k == pl.num_programs(2) - 1)
    def _():
        o_ref[...] = acc_ref[...].astype(o_ref.dtype)


def relu_self_matmul(x: jax.Array, *, tm: int = 256, tn: int = 256,
                     tk: int = 512) -> jax.Array:
    """z = relu(x) @ relu(x).T for a 2-D x, as a tiled Pallas TPU kernel."""
    M, K = x.shape

    # Clamp tile sizes for small problems while keeping TPU tiling legality:
    # second-to-last block dims multiple of 8, last block dims multiple of 128
    # (or equal to the full padded array dim).
    tm = min(tm, _round_up(M, 8))
    tn = min(tn, _round_up(M, 8))
    tk = min(tk, _round_up(K, 128))

    m_pad = _round_up(M, tm)
    k_pad = _round_up(K, tk)
    xp = x
    if (m_pad, k_pad) != (M, K):
        # Zero padding is semantically neutral: relu(0) = 0 adds nothing to the
        # contraction; padded output rows/cols are sliced away below.
        xp = jnp.pad(x, ((0, m_pad - M), (0, k_pad - K)))

    grid = (m_pad // tm, m_pad // tn, k_pad // tk)

    out = pl.pallas_call(
        _relu_gram_kernel,
        out_shape=jax.ShapeDtypeStruct((m_pad, m_pad), x.dtype),
        grid_spec=pltpu.PrefetchScalarGridSpec(
            num_scalar_prefetch=0,
            grid=grid,
            in_specs=[
                # lhs rows of relu(x): tile (i, k)
                pl.BlockSpec((tm, tk), lambda i, j, k: (i, k)),
                # rhs rows of relu(x): tile (j, k) — plays the role of y^T
                pl.BlockSpec((tn, tk), lambda i, j, k: (j, k)),
            ],
            out_specs=pl.BlockSpec((tm, tn), lambda i, j, k: (i, j)),
            scratch_shapes=[pltpu.VMEM((tm, tn), jnp.float32)],
        ),
        compiler_params=pltpu.CompilerParams(
            dimension_semantics=("parallel", "parallel", "arbitrary")
        ),
    )(xp, xp)

    if m_pad != M:
        out = out[:M, :M]
    return out


if __name__ == "__main__":
    key = jax.random.PRNGKey(0)
    k_small, k_big = jax.random.split(key)

    # Small shape implied by the module: seq=8, hidden=32.
    x_small = jax.random.normal(k_small, (8, 32), dtype=jnp.float32)
    z_small = relu_self_matmul(x_small)
    jax.block_until_ready(z_small)

    y_small = jnp.maximum(x_small, 0.0)
    ref_small = y_small @ y_small.T
    assert z_small.shape == (8, 8), z_small.shape
    assert jnp.allclose(z_small, ref_small, atol=1e-5, rtol=1e-5), \
        "small-case mismatch vs reference"

    # Larger shape that actually exercises the tiled (i, j, k) path: grid (2,2,2).
    x_big = jax.random.normal(k_big, (512, 1024), dtype=jnp.float32)
    z_big = relu_self_matmul(x_big)
    jax.block_until_ready(z_big)

    y_big = jnp.maximum(x_big, 0.0)
    ref_big = jnp.dot(y_big, y_big.T, precision=lax.Precision.HIGHEST)
    assert z_big.shape == (512, 512), z_big.shape
    rel_err = jnp.max(jnp.abs(z_big - ref_big)) / (jnp.max(jnp.abs(ref_big)) + 1e-6)
    assert rel_err < 1e-2, f"big-case relative error too large: {rel_err}"

    print("KERNEL_OK")
</pallas_src>

<mosaic_0001>
module attributes {stable_mosaic.version = 11 : i64} {
  func.func @_relu_gram_kernel(%arg0: i32, %arg1: i32, %arg2: i32, %arg3: memref<8x128xf32, #tpu.memory_space<vmem>>, %arg4: memref<8x128xf32, #tpu.memory_space<vmem>>, %arg5: memref<8x8xf32, #tpu.memory_space<vmem>>, %arg6: memref<8x8xf32, #tpu.memory_space<vmem>>) attributes {dimension_semantics = [#tpu.dimension_semantics<parallel>, #tpu.dimension_semantics<parallel>, #tpu.dimension_semantics<arbitrary>], iteration_bounds = array<i64: 1, 1, 1>, scalar_prefetch = 0 : i64, scratch_operands = 1 : i64, tpu.core_type = #tpu.core_type<tc>, window_params = [{transform_indices = @transform_0, window_bounds = array<i64: 8, 128>}, {transform_indices = @transform_1, window_bounds = array<i64: 8, 128>}, {transform_indices = @transform_2, window_bounds = array<i64: 8, 8>}]} {
    %c0_i32 = arith.constant 0 : i32
    %0 = arith.cmpi eq, %arg2, %c0_i32 : i32
    %1 = arith.extui %0 : i1 to i32
    %c0_i32_0 = arith.constant 0 : i32
    %2 = arith.cmpi ne, %1, %c0_i32_0 : i32
    scf.if %2 {
      %cst_12 = arith.constant 0.000000e+00 : f32
      %16 = vector.broadcast %cst_12 : f32 to vector<8x8xf32>
      %c0_13 = arith.constant 0 : index
      %c0_14 = arith.constant 0 : index
      %17 = vector.load %arg6[%c0_13, %c0_14] : memref<8x8xf32, #tpu.memory_space<vmem>>, vector<8x8xf32>
      tpu.vector_store %arg6[%c0_13, %c0_14], %16 {strides = array<i32>} : memref<8x8xf32, #tpu.memory_space<vmem>>, vector<8x8xf32>,
    } else {
    }
    %c0 = arith.constant 0 : index
    %c0_1 = arith.constant 0 : index
    %3 = vector.load %arg3[%c0, %c0_1] : memref<8x128xf32, #tpu.memory_space<vmem>>, vector<8x128xf32>
    %cst = arith.constant 0.000000e+00 : f32
    %4 = vector.broadcast %cst : f32 to vector<8x128xf32>
    %5 = arith.maximumf %3, %4 : vector<8x128xf32>
    %c0_2 = arith.constant 0 : index
    %c0_3 = arith.constant 0 : index
    %6 = vector.load %arg4[%c0_2, %c0_3] : memref<8x128xf32, #tpu.memory_space<vmem>>, vector<8x128xf32>
    %cst_4 = arith.constant 0.000000e+00 : f32
    %7 = vector.broadcast %cst_4 : f32 to vector<8x128xf32>
    %8 = arith.maximumf %6, %7 : vector<8x128xf32>
    %c0_5 = arith.constant 0 : index
    %c0_6 = arith.constant 0 : index
    %9 = vector.load %arg6[%c0_5, %c0_6] : memref<8x8xf32, #tpu.memory_space<vmem>>, vector<8x8xf32>
    %cst_7 = arith.constant dense<0.000000e+00> : vector<8x8xf32>
    %10 = tpu.matmul %5, %8, %cst_7 {dimension_numbers = #tpu.dot_dimension_numbers<[1], [1], [0], [0], [0, 0, 1, 0], [], []>} : vector<8x128xf32>, vector<8x128xf32>, vector<8x8xf32> -> vector<8x8xf32>
    %11 = arith.addf %9, %10 : vector<8x8xf32>
    %c0_8 = arith.constant 0 : index
    %c0_9 = arith.constant 0 : index
    %12 = vector.load %arg6[%c0_8, %c0_9] : memref<8x8xf32, #tpu.memory_space<vmem>>, vector<8x8xf32>
    tpu.vector_store %arg6[%c0_8, %c0_9], %11 {strides = array<i32>} : memref<8x8xf32, #tpu.memory_space<vmem>>, vector<8x8xf32>,
    %c0_i32_10 = arith.constant 0 : i32
    %13 = arith.cmpi eq, %arg2, %c0_i32_10 : i32
    %14 = arith.extui %13 : i1 to i32
    %c0_i32_11 = arith.constant 0 : i32
    %15 = arith.cmpi ne, %14, %c0_i32_11 : i32
    scf.if %15 {
      %c0_12 = arith.constant 0 : index
      %c0_13 = arith.constant 0 : index
      %16 = vector.load %arg6[%c0_12, %c0_13] : memref<8x8xf32, #tpu.memory_space<vmem>>, vector<8x8xf32>
      %c0_14 = arith.constant 0 : index
      %c0_15 = arith.constant 0 : index
      %17 = vector.load %arg5[%c0_14, %c0_15] : memref<8x8xf32, #tpu.memory_space<vmem>>, vector<8x8xf32>
      tpu.vector_store %arg5[%c0_14, %c0_15], %16 {strides = array<i32>} : memref<8x8xf32, #tpu.memory_space<vmem>>, vector<8x8xf32>,
    } else {
    }
    return
  }
  func.func @transform_0(%arg0: i32, %arg1: i32, %arg2: i32) -> (i32, i32) {
    %c0_i32 = arith.constant 0 : i32
    return %arg0, %arg2 : i32, i32
  }
  func.func @transform_1(%arg0: i32, %arg1: i32, %arg2: i32) -> (i32, i32) {
    %c0_i32 = arith.constant 0 : i32
    return %arg1, %arg2 : i32, i32
  }
  func.func @transform_2(%arg0: i32, %arg1: i32, %arg2: i32) -> (i32, i32) {
    %c0_i32 = arith.constant 0 : i32
    return %arg0, %arg1 : i32, i32
  }
}

</mosaic_0001>

<llo_original>
// kernel: tpu_custom_call.1
$region0: #{tpu_custom_call.1}
  #allocation0 [shape = 'u32[]', space=smem, size = 0x4, offset = 0x4, fixed_abs, tag = 'smem constant byte address 0x4 - core index']
  #allocation1 [shape = 'u32[144,128]{1,0:T(1,128)}', space=vmem, size = 0x12000, scoped, tag = 'internal scratch']
  #allocation2 [shape = 'f32[8,8]{1,0:T(8,128)}', space=vmem, size = 0x1000, scoped, tag = 'scratch operand']
  %s0 = inlined_call_operand.hbm [shape: f32[8,128], index: 0, kind: input, shape index: {}]
  %s1 = inlined_call_operand.hbm [shape: f32[8,128], index: 1, kind: input, shape index: {}]
  %s2 = inlined_call_operand.hbm [shape: f32[8,8], index: 2, kind: output, shape index: {}]
  %s3 = sld [smem:[#allocation0]]
  $region34: #{tpu_custom_call.1} parent=0
    _
  %s5 = ssub.s32 1, %s3
  %s6 = scalar_select 0, %s5, %s3
  $region1: #{tpu_custom_call.1} parent=0
    #allocation3 [shape = 'u8[4096]{0}', space=vmem, size = 0x1000, scoped, tag = 'input window, operand 0, single buffered']
    #allocation4 [shape = 's32[1]{0}', space=sflag, size = 0x4, scoped, tag = 'scoped memory for tpu_custom_call.1']
    #allocation5 [shape = 's32[1]{0}', space=sflag, size = 0x4, scoped, tag = 'scoped memory for tpu_custom_call.1']
    #allocation6 [shape = 'u8[4096]{0}', space=vmem, size = 0x1000, scoped, tag = 'input window, operand 1, single buffered']
    #allocation7 [shape = 's32[1]{0}', space=sflag, size = 0x4, scoped, tag = 'scoped memory for tpu_custom_call.1']
    #allocation8 [shape = 'u8[4096]{0}', space=vmem, size = 0x1000, scoped, tag = 'output window, operand 0, single buffered']
    %7 = vsyncpa [#allocation4], 0
    %8 = vsyncpa [#allocation7], 0
    %9 = vsyncpa [#allocation5], 0
    // Predicated region
    $region2: #{tpu_custom_call.1} parent=1 // pred_check
      _
    $region3: #{tpu_custom_call.1} parent=1 // pred_check_branch
      %11 = sbr.rel (0) target = $region5
    $region4: #{tpu_custom_call.1} parent=1 // pred_region
      %s13 = ssub.s32 128, 128
      %14 = vsyncadd [#allocation4], %s13
      %s16 = sshll.u32 [#allocation3], 4
      %s17 = int_to_ptr.vmem [resolvable:$true] %s16
      %19 = dma.hbm_to_vmem [thread:$0]  %s0, 128, %s17, [#allocation4]
    $region5: #{tpu_custom_call.1} parent=1 // pred_fallthru
      _
    // Predicated region
    $region6: #{tpu_custom_call.1} parent=1 // pred_check
      _
    $region7: #{tpu_custom_call.1} parent=1 // pred_check_branch
      %21 = sbr.rel (0) target = $region9
    $region8: #{tpu_custom_call.1} parent=1 // pred_region
      %s23 = ssub.s32 128, 128
      %24 = vsyncadd [#allocation7], %s23
      %s26 = sshll.u32 [#allocation6], 4
      %s27 = int_to_ptr.vmem [resolvable:$true] %s26
      %29 = dma.hbm_to_vmem [thread:$0]  %s1, 128, %s27, [#allocation7]
    $region9: #{tpu_custom_call.1} parent=1 // pred_fallthru
      _
    // Predicated region
    $region10: #{tpu_custom_call.1} parent=1 // pred_check
      _
    $region11: #{tpu_custom_call.1} parent=1 // pred_check_branch
      %31 = sbr.rel (0) target = $region13
    $region12: #{tpu_custom_call.1} parent=1 // pred_region
      %32 = dma.done [#allocation4], 128
    $region13: #{tpu_custom_call.1} parent=1 // pred_fallthru
      _
    // Predicated region
    $region14: #{tpu_custom_call.1} parent=1 // pred_check
      _
    $region15: #{tpu_custom_call.1} parent=1 // pred_check_branch
      %34 = sbr.rel (0) target = $region17
    $region16: #{tpu_custom_call.1} parent=1 // pred_region
      %35 = dma.done [#allocation7], 128
    $region17: #{tpu_custom_call.1} parent=1 // pred_fallthru
      _
    %p36 = scmp.eq.s32.totalorder 0, 0
    // Predicated region
    $region18: #{tpu_custom_call.1} parent=1 // pred_check
      %p37 = pneg %p36
    $region19: #{tpu_custom_call.1} parent=1 // pred_check_branch
      %39 = sbr.rel (%p37) target = $region21
    $region20: #{tpu_custom_call.1} parent=1 // pred_region
      %vm40 = vcmask 64512
      %41 = vst.msk [vmem:[#allocation2] sm:$0xff] %vm40, 0.0
    $region21: #{tpu_custom_call.1} parent=1 // pred_fallthru
      _
    %v42 = vld [vmem:[#allocation3] sm:$0xff]
    %v43 = vmax.f32 %v42, 0.0
    %v44 = vld [vmem:[#allocation6] sm:$0xff]
    %v45 = vmax.f32 %v44, 0.0
    %v46 = vld [vmem:[#allocation2] sm:$0xff]
    %47 = vmatprep.subr.mxu0 0.0
    %48 = vmatpush1.xpose.msra.mxu0 %v45
    %49 = vmatprep.subr.mxu0 0.0
    %50 = vmatpush1.xpose.msra.mxu0 0.0
    %51 = vmatprep.subr.mxu0 0.0
    %52 = vmatpush1.xpose.msra.mxu0 0.0
    %53 = vmatprep.subr.mxu0 0.0
    %54 = vmatpush1.xpose.msra.mxu0 0.0
    %55 = vmatprep.subr.mxu0 0.0
    %56 = vmatpush1.xpose.msra.mxu0 0.0
    %57 = vmatprep.subr.mxu0 0.0
    %58 = vmatpush1.xpose.msra.mxu0 0.0
    %59 = vmatprep.subr.mxu0 0.0
    %60 = vmatpush1.xpose.msra.mxu0 0.0
    %61 = vmatprep.subr.mxu0 0.0
    %62 = vmatpush1.xpose.msra.mxu0 0.0
    %63 = vmatprep.subr.mxu0 0.0
    %64 = vmatpush1.xpose.msra.mxu0 0.0
    %65 = vmatprep.subr.mxu0 0.0
    %66 = vmatpush1.xpose.msra.mxu0 0.0
    %67 = vmatprep.subr.mxu0 0.0
    %68 = vmatpush1.xpose.msra.mxu0 0.0
    %69 = vmatprep.subr.mxu0 0.0
    %70 = vmatpush1.xpose.msra.mxu0 0.0
    %71 = vmatprep.subr.mxu0 0.0
    %72 = vmatpush1.xpose.msra.mxu0 0.0
    %73 = vmatprep.subr.mxu0 0.0
    %74 = vmatpush1.xpose.msra.mxu0 0.0
    %75 = vmatprep.subr.mxu0 0.0
    %76 = vmatpush1.xpose.msra.mxu0 0.0
    %77 = vmatprep.subr.mxu0 0.0
    %78 = vmatpush1.xpose.msra.mxu0 0.0
    %79 = vmatprep.subr.mxu0 0.0
    %80 = vmatpush1.xpose.msra.mxu0 0.0
    %81 = vmatprep.subr.mxu0 0.0
    %82 = vmatpush1.xpose.msra.mxu0 0.0
    %83 = vmatprep.subr.mxu0 0.0
    %84 = vmatpush1.xpose.msra.mxu0 0.0
    %85 = vmatprep.subr.mxu0 0.0
    %86 = vmatpush1.xpose.msra.mxu0 0.0
    %87 = vmatprep.subr.mxu0 0.0
    %88 = vmatpush1.xpose.msra.mxu0 0.0
    %89 = vmatprep.subr.mxu0 0.0
    %90 = vmatpush1.xpose.msra.mxu0 0.0
    %91 = vmatprep.subr.mxu0 0.0
    %92 = vmatpush1.xpose.msra.mxu0 0.0
    %93 = vmatprep.subr.mxu0 0.0
    %94 = vmatpush1.xpose.msra.mxu0 0.0
    %95 = vmatprep.subr.mxu0 0.0
    %96 = vmatpush1.xpose.msra.mxu0 0.0
    %97 = vmatprep.subr.mxu0 0.0
    %98 = vmatpush1.xpose.msra.mxu0 0.0
    %99 = vmatprep.subr.mxu0 0.0
    %100 = vmatpush1.xpose.msra.mxu0 0.0
    %101 = vmatprep.subr.mxu0 0.0
    %102 = vmatpush1.xpose.msra.mxu0 0.0
    %103 = vmatprep.subr.mxu0 0.0
    %104 = vmatpush1.xpose.msra.mxu0 0.0
    %105 = vmatprep.subr.mxu0 0.0
    %106 = vmatpush1.xpose.msra.mxu0 0.0
    %107 = vmatprep.subr.mxu0 0.0
    %108 = vmatpush1.xpose.msra.mxu0 0.0
    %109 = vmatprep.subr.mxu0 0.0
    %110 = vmatpush1.xpose.msra.mxu0 0.0
    %111 = vmatprep.mubr.f32.mxu0 0.0
    %112 = vmatmul.mubr.f32.gmra.mrb[0].mxu0 %v43
    %v113 = vpop.f32.mrb[0].mxu0
    %v114 = vadd.f32 0.0, %v113
    %v115 = vpop.f32.mrb[0].mxu0
    %116 = vdwg.mxu0
    %v117 = vadd.f32 %v46, %v114
    %vm118 = vcmask 64512
    %119 = vst.msk [vmem:[#allocation2] sm:$0xff] %vm118, %v117
    // Predicated region
    $region22: #{tpu_custom_call.1} parent=1 // pred_check
      %p120 = pneg %p36
    $region23: #{tpu_custom_call.1} parent=1 // pred_check_branch
      %122 = sbr.rel (%p120) target = $region25
    $region24: #{tpu_custom_call.1} parent=1 // pred_region
      %v123 = vld [vmem:[#allocation2] sm:$0xff]
      %124 = vst.msk [vmem:[#allocation8] sm:$0xff] %vm118, %v123
    $region25: #{tpu_custom_call.1} parent=1 // pred_fallthru
      _
    // Predicated region
    $region26: #{tpu_custom_call.1} parent=1 // pred_check
      _
    $region27: #{tpu_custom_call.1} parent=1 // pred_check_branch
      %126 = sbr.rel (0) target = $region29
    $region28: #{tpu_custom_call.1} parent=1 // pred_region
      %s128 = ssub.s32 128, 128
      %129 = vsyncadd [#allocation5], %s128
      %s131 = sshll.u32 [#allocation8], 4
      %s132 = int_to_ptr.vmem [resolvable:$true] %s131
      %134 = dma.vmem_to_hbm [thread:$0]  %s132, 128, %s2, [#allocation5]
    $region29: #{tpu_custom_call.1} parent=1 // pred_fallthru
      _
    // Predicated region
    $region30: #{tpu_custom_call.1} parent=1 // pred_check
      _
    $region31: #{tpu_custom_call.1} parent=1 // pred_check_branch
      %136 = sbr.rel (0) target = $region33
    $region32: #{tpu_custom_call.1} parent=1 // pred_region
      %137 = dma.done [#allocation5], 128
    $region33: #{tpu_custom_call.1} parent=1 // pred_fallthru
      _
    %138 = vsyncpa [#allocation4], 1
    %139 = vsyncpa [#allocation7], 1
    %140 = vsyncpa [#allocation5], 1

</llo_original>
